<compile_context>
chip_gen: v5e
topology: v5e:2x2
jax: 0.10.0
libtpu: 0.0.40
codegen_flags: <defaults>
</compile_context>

<pallas_src>
import functools

import jax
import jax.numpy as jnp
from jax import lax
from jax.experimental import pallas as pl
from jax.experimental.pallas import tpu as pltpu


def _round_up(v, m):
    return (v + m - 1) // m * m


def _dmpnn_kernel(
    x_ref, ea_ref,
    s_src_ref, s_tgt_ref, s_srcT_ref, s_tgtT_ref,
    wi_x_ref, wi_e_ref, bi_ref,
    wh1_ref, bh1_ref, wh2_ref, bh2_ref,
    wf_x_ref, wf_m_ref, bf_ref,
    gamma_ref, beta_ref,
    out_ref,
    *, steps: int, eps: float, d_real: int,
):
    f32 = jnp.float32
    bf16 = jnp.bfloat16

    x = x_ref[...]            # [N, F]   f32
    ea = ea_ref[...]          # [E, Fe]  f32
    s_src = s_src_ref[...]    # [E, N]   bf16 one-hot(edge_index[0])
    s_tgt = s_tgt_ref[...]    # [E, N]   bf16 one-hot(edge_index[1])
    s_srcT = s_srcT_ref[...]  # [N, E]   bf16 (pre-transposed in the wrapper)
    s_tgtT = s_tgtT_ref[...]  # [N, E]   bf16

    e_rows = s_src.shape[0]
    d_pad = wi_x_ref.shape[1]

    # Hoisted loop-invariant weights / biases (loaded + broadcast exactly once;
    # the Python `for` below is fully unrolled and JAX does not CSE broadcasts).
    wh1 = wh1_ref[...]
    wh2 = wh2_ref[...]
    bh1 = jnp.broadcast_to(bh1_ref[...], (e_rows, d_pad))
    bh2 = jnp.broadcast_to(bh2_ref[...], (e_rows, d_pad))

    # Gather x[edge_index[0]] via bf16 one-hot matmul on the MXU, f32 accumulate.
    x_src = jnp.dot(s_src, x.astype(bf16), preferred_element_type=f32)  # [E, F]

    # dense_init on concat(x_src, edge_attr): split-weight formulation
    # (x_src @ W[:F] + edge_attr @ W[F:]) == concat(...) @ W   (kept in f32).
    h0 = (jnp.dot(x_src, wi_x_ref[...], preferred_element_type=f32)
          + jnp.dot(ea, wi_e_ref[...], preferred_element_type=f32)
          + bi_ref[...])
    h0 = jnp.maximum(h0, 0.0)                                            # [E, D]

    h = h0
    for _ in range(steps):  # small static trip count -> unrolled at trace time
        hb = h.astype(bf16)
        # scatter_add(h, tgt) then gather back at tgt: both as lane-aligned
        # bf16 matmuls; the pre-transposed S_tgt^T avoids in-kernel transposes.
        h_sum = jnp.dot(s_tgtT, hb, preferred_element_type=f32)          # [N, D]
        m = jnp.dot(s_tgt, h_sum.astype(bf16),
                    preferred_element_type=f32) - h                      # [E, D]
        # dense_hidden = Linear -> ReLU -> Linear (f32 MLP)
        hh = jnp.maximum(jnp.dot(m, wh1, preferred_element_type=f32) + bh1, 0.0)
        hh = jnp.dot(hh, wh2, preferred_element_type=f32) + bh2
        h = jnp.maximum(h0 + hh, 0.0)

    # m = scatter_add(h, edge_index[0], dim_size=N)
    m_node = jnp.dot(s_srcT, h.astype(bf16), preferred_element_type=f32)  # [N, D]

    # dense_final on concat(x, m_node), then ReLU
    z = (jnp.dot(x, wf_x_ref[...], preferred_element_type=f32)
         + jnp.dot(m_node, wf_m_ref[...], preferred_element_type=f32)
         + bf_ref[...])
    z = jnp.maximum(z, 0.0)   # [N, D_pad]; padded columns are exactly zero

    # LayerNorm over the real feature width only.  Padded columns of z are
    # exactly zero (zero-padded weights/biases), so the sums are unaffected;
    # mask zc before squaring so the variance matches the reference.
    lane = lax.broadcasted_iota(jnp.int32, (1, d_pad), 1)
    mask = (lane < d_real).astype(f32)
    inv_d = 1.0 / d_real
    mu = jnp.sum(z, axis=-1, keepdims=True) * inv_d
    zc = (z - mu) * mask
    var = jnp.sum(zc * zc, axis=-1, keepdims=True) * inv_d
    y = zc * lax.rsqrt(var + eps) * gamma_ref[...] + beta_ref[...]

    # final ReLU; dropout is identity (eval mode)
    # TODO(synk): training-mode dropout (pltpu.prng_* mask) not implemented.
    out_ref[...] = jnp.maximum(y, 0.0)


def dmpnn_forward(x, edge_feats, edge_index, params, *, steps):
    """XLA-side plumbing (padding, one-hot build, transposes) + one Pallas call."""
    x = x.astype(jnp.float32)
    edge_feats = edge_feats.astype(jnp.float32)
    n_nodes, f_in = x.shape
    n_edges, f_edge = edge_feats.shape
    d_out = params["w_init_x"].shape[1]

    # Sublane/lane-friendly padded sizes.
    n_pad = _round_up(n_nodes, 8)
    e_pad = _round_up(n_edges, 8)
    d_pad = _round_up(d_out, 128)

    def pad2(a, rows, cols):
        return jnp.pad(a, ((0, rows - a.shape[0]), (0, cols - a.shape[1])))

    x_p = pad2(x, n_pad, f_in)
    ea_p = pad2(edge_feats, e_pad, f_edge)

    # One-hot gather/scatter matrices built directly in bf16 (0/1 exact).
    # Padded edge slots use an out-of-range index -> all-zero one-hot row,
    # contributing nothing to any gather/scatter.
    src = jnp.pad(edge_index[0], (0, e_pad - n_edges), constant_values=n_pad)
    tgt = jnp.pad(edge_index[1], (0, e_pad - n_edges), constant_values=n_pad)
    s_src = jax.nn.one_hot(src, n_pad, dtype=jnp.bfloat16)    # [E, N]
    s_tgt = jax.nn.one_hot(tgt, n_pad, dtype=jnp.bfloat16)    # [E, N]
    s_srcT = s_src.T                                          # [N, E] plumbing
    s_tgtT = s_tgt.T                                          # [N, E]

    # Zero-pad all weights/biases so every intermediate is d_pad lanes wide.
    wi_x = pad2(params["w_init_x"], f_in, d_pad)
    wi_e = pad2(params["w_init_e"], f_edge, d_pad)
    bi = pad2(params["b_init"], 1, d_pad)
    wh1 = pad2(params["w_h1"], d_pad, d_pad)
    bh1 = pad2(params["b_h1"], 1, d_pad)
    wh2 = pad2(params["w_h2"], d_pad, d_pad)
    bh2 = pad2(params["b_h2"], 1, d_pad)
    wf_x = pad2(params["w_fin_x"], f_in, d_pad)
    wf_m = pad2(params["w_fin_m"], d_pad, d_pad)
    bf = pad2(params["b_fin"], 1, d_pad)
    gamma = pad2(params["gamma"], 1, d_pad)
    beta = pad2(params["beta"], 1, d_pad)

    inputs = (x_p, ea_p, s_src, s_tgt, s_srcT, s_tgtT,
              wi_x, wi_e, bi, wh1, bh1, wh2, bh2, wf_x, wf_m, bf, gamma, beta)

    # VMEM budget / size guard (single-shot VMEM-resident design).
    in_bytes = sum(int(a.size) * a.dtype.itemsize for a in inputs)
    out_bytes = n_pad * d_pad * 4
    scratch_bytes = (5 * e_pad + 2 * n_pad) * d_pad * 4  # h0,h,m,hh,x_src,h_sum,m_node
    footprint = in_bytes + out_bytes + scratch_bytes
    if 2 * footprint > 60 * 1024 * 1024:
        # TODO(synk): E-tiled, scalar-prefetched gather/scatter variant needed here.
        raise ValueError(
            "graph too large for the single-shot VMEM-resident d-MPNN kernel")
    vmem_limit = int(min(max(4 * footprint, 16 << 20), 64 << 20))

    flops = (2 * e_pad * n_pad * f_in                       # x_src gather
             + 2 * e_pad * (f_in + f_edge) * d_pad          # dense_init
             + steps * (4 * e_pad * n_pad * d_pad           # scatter + gather
                        + 4 * e_pad * d_pad * d_pad)        # hidden MLP
             + 2 * e_pad * n_pad * d_pad                    # final scatter
             + 2 * n_pad * (f_in + d_pad) * d_pad)          # dense_final
    cost = pl.CostEstimate(flops=flops, transcendentals=n_pad,
                           bytes_accessed=in_bytes + out_bytes)

    vmem_spec = pl.BlockSpec(memory_space=pltpu.MemorySpace.VMEM)
    out_p = pl.pallas_call(
        functools.partial(_dmpnn_kernel, steps=steps, eps=1e-5, d_real=d_out),
        out_shape=jax.ShapeDtypeStruct((n_pad, d_pad), jnp.float32),
        in_specs=[vmem_spec] * len(inputs),
        out_specs=vmem_spec,
        compiler_params=pltpu.CompilerParams(vmem_limit_bytes=vmem_limit),
        cost_estimate=cost,
    )(*inputs)
    return out_p[:n_nodes, :d_out]


def make_params(key, input_size, output_size, edge_in):
    """Deterministic parameter init mirroring the module's layer shapes.

    PyTorch Linear(in, out) weight is [out, in]; here weights are stored
    transposed [in, out] so the kernel computes h @ W + b directly.
    Concatenation weights are split row-wise (exactly equivalent).
    """
    ks = jax.random.split(key, 8)

    def unif(k, shape, fan_in):
        bound = 1.0 / jnp.sqrt(fan_in)
        return jax.random.uniform(k, shape, jnp.float32, -bound, bound)

    fi = input_size + edge_in
    w_init = unif(ks[0], (fi, output_size), fi)
    ff = input_size + output_size
    w_fin = unif(ks[1], (ff, output_size), ff)
    return dict(
        w_init_x=w_init[:input_size],
        w_init_e=w_init[input_size:],
        b_init=unif(ks[2], (1, output_size), fi),
        w_h1=unif(ks[3], (output_size, output_size), output_size),
        b_h1=unif(ks[4], (1, output_size), output_size),
        w_h2=unif(ks[5], (output_size, output_size), output_size),
        b_h2=unif(ks[6], (1, output_size), output_size),
        w_fin_x=w_fin[:input_size],
        w_fin_m=w_fin[input_size:],
        b_fin=unif(ks[7], (1, output_size), ff),
        gamma=jnp.ones((1, output_size), jnp.float32),   # LayerNorm default init
        beta=jnp.zeros((1, output_size), jnp.float32),
    )


def dmpnn_reference(x, edge_feats, edge_index, params, *, steps):
    """Pure-JAX f32 reference of the PyTorch forward (eval mode)."""
    x = x.astype(jnp.float32)
    ea = edge_feats.astype(jnp.float32)
    n = x.shape[0]
    src, tgt = edge_index[0], edge_index[1]
    relu = jax.nn.relu
    h0 = relu(x[src] @ params["w_init_x"] + ea @ params["w_init_e"]
              + params["b_init"])
    h = h0
    for _ in range(steps):
        h_sum = jax.ops.segment_sum(h, tgt, num_segments=n)
        m = h_sum[tgt] - h
        hh = relu(m @ params["w_h1"] + params["b_h1"]) @ params["w_h2"] + params["b_h2"]
        h = relu(h0 + hh)
    m_node = jax.ops.segment_sum(h, src, num_segments=n)
    z = relu(x @ params["w_fin_x"] + m_node @ params["w_fin_m"] + params["b_fin"])
    mu = jnp.mean(z, axis=-1, keepdims=True)
    var = jnp.mean((z - mu) ** 2, axis=-1, keepdims=True)
    y = (z - mu) / jnp.sqrt(var + 1e-5) * params["gamma"] + params["beta"]
    return relu(y)


if __name__ == "__main__":
    input_size, edge_in, output_size, steps = 16, 8, 32, 3
    n_nodes, n_edges = 8, 16

    key = jax.random.PRNGKey(0)
    k_x, k_e, k_s, k_t, k_p = jax.random.split(key, 5)
    x = jax.random.normal(k_x, (n_nodes, input_size), jnp.float32)
    edge_feats = jax.random.normal(k_e, (n_edges, edge_in), jnp.float32)
    edge_index = jnp.stack([
        jax.random.randint(k_s, (n_edges,), 0, n_nodes),
        jax.random.randint(k_t, (n_edges,), 0, n_nodes),
    ], axis=0).astype(jnp.int32)  # [2, E]
    params = make_params(k_p, input_size, output_size, edge_in)

    out = dmpnn_forward(x, edge_feats, edge_index, params, steps=steps)
    out = jax.block_until_ready(out)

    ref = dmpnn_reference(x, edge_feats, edge_index, params, steps=steps)
    assert out.shape == (n_nodes, output_size)
    # bf16 is used only on the one-hot gather/scatter matmul operands (with f32
    # accumulation), so a slightly loosened tolerance vs the f32 reference.
    assert jnp.allclose(out, ref, rtol=3e-2, atol=3e-2), (
        float(jnp.max(jnp.abs(out - ref))))
    print("KERNEL_OK")
</pallas_src>

<mosaic_0001>
module attributes {stable_mosaic.version = 11 : i64} {
  func.func @_dmpnn_kernel(%arg0: memref<8x16xf32, #tpu.memory_space<vmem>>, %arg1: memref<16x8xf32, #tpu.memory_space<vmem>>, %arg2: memref<16x8xbf16, #tpu.memory_space<vmem>>, %arg3: memref<16x8xbf16, #tpu.memory_space<vmem>>, %arg4: memref<8x16xbf16, #tpu.memory_space<vmem>>, %arg5: memref<8x16xbf16, #tpu.memory_space<vmem>>, %arg6: memref<16x128xf32, #tpu.memory_space<vmem>>, %arg7: memref<8x128xf32, #tpu.memory_space<vmem>>, %arg8: memref<1x128xf32, #tpu.memory_space<vmem>>, %arg9: memref<128x128xf32, #tpu.memory_space<vmem>>, %arg10: memref<1x128xf32, #tpu.memory_space<vmem>>, %arg11: memref<128x128xf32, #tpu.memory_space<vmem>>, %arg12: memref<1x128xf32, #tpu.memory_space<vmem>>, %arg13: memref<16x128xf32, #tpu.memory_space<vmem>>, %arg14: memref<128x128xf32, #tpu.memory_space<vmem>>, %arg15: memref<1x128xf32, #tpu.memory_space<vmem>>, %arg16: memref<1x128xf32, #tpu.memory_space<vmem>>, %arg17: memref<1x128xf32, #tpu.memory_space<vmem>>, %arg18: memref<8x128xf32, #tpu.memory_space<vmem>>) attributes {dimension_semantics = [], scalar_prefetch = 0 : i64, scratch_operands = 0 : i64, tpu.core_type = #tpu.core_type<tc>} {
    %c0 = arith.constant 0 : index
    %c0_0 = arith.constant 0 : index
    %0 = vector.load %arg0[%c0, %c0_0] : memref<8x16xf32, #tpu.memory_space<vmem>>, vector<8x16xf32>
    %c0_1 = arith.constant 0 : index
    %c0_2 = arith.constant 0 : index
    %1 = vector.load %arg1[%c0_1, %c0_2] : memref<16x8xf32, #tpu.memory_space<vmem>>, vector<16x8xf32>
    %c0_3 = arith.constant 0 : index
    %c0_4 = arith.constant 0 : index
    %2 = vector.load %arg2[%c0_3, %c0_4] : memref<16x8xbf16, #tpu.memory_space<vmem>>, vector<16x8xbf16>
    %c0_5 = arith.constant 0 : index
    %c0_6 = arith.constant 0 : index
    %3 = vector.load %arg3[%c0_5, %c0_6] : memref<16x8xbf16, #tpu.memory_space<vmem>>, vector<16x8xbf16>
    %c0_7 = arith.constant 0 : index
    %c0_8 = arith.constant 0 : index
    %4 = vector.load %arg4[%c0_7, %c0_8] : memref<8x16xbf16, #tpu.memory_space<vmem>>, vector<8x16xbf16>
    %c0_9 = arith.constant 0 : index
    %c0_10 = arith.constant 0 : index
    %5 = vector.load %arg5[%c0_9, %c0_10] : memref<8x16xbf16, #tpu.memory_space<vmem>>, vector<8x16xbf16>
    %c0_11 = arith.constant 0 : index
    %c0_12 = arith.constant 0 : index
    %6 = vector.load %arg9[%c0_11, %c0_12] : memref<128x128xf32, #tpu.memory_space<vmem>>, vector<128x128xf32>
    %c0_13 = arith.constant 0 : index
    %c0_14 = arith.constant 0 : index
    %7 = vector.load %arg11[%c0_13, %c0_14] : memref<128x128xf32, #tpu.memory_space<vmem>>, vector<128x128xf32>
    %c0_15 = arith.constant 0 : index
    %c0_16 = arith.constant 0 : index
    %8 = vector.load %arg10[%c0_15, %c0_16] : memref<1x128xf32, #tpu.memory_space<vmem>>, vector<1x128xf32>
    %9 = vector.shape_cast %8 : vector<1x128xf32> to vector<1x128xf32>
    %10 = vector.broadcast %9 : vector<1x128xf32> to vector<16x128xf32>
    %c0_17 = arith.constant 0 : index
    %c0_18 = arith.constant 0 : index
    %11 = vector.load %arg12[%c0_17, %c0_18] : memref<1x128xf32, #tpu.memory_space<vmem>>, vector<1x128xf32>
    %12 = vector.shape_cast %11 : vector<1x128xf32> to vector<1x128xf32>
    %13 = vector.broadcast %12 : vector<1x128xf32> to vector<16x128xf32>
    %14 = arith.truncf %0 : vector<8x16xf32> to vector<8x16xbf16>
    %cst = arith.constant dense<0.000000e+00> : vector<16x16xf32>
    %15 = tpu.matmul %2, %14, %cst {dimension_numbers = #tpu.dot_dimension_numbers<[1], [0], [0], [1], [0, 0, 1, 1], [], []>} : vector<16x8xbf16>, vector<8x16xbf16>, vector<16x16xf32> -> vector<16x16xf32>
    %c0_19 = arith.constant 0 : index
    %c0_20 = arith.constant 0 : index
    %16 = vector.load %arg6[%c0_19, %c0_20] : memref<16x128xf32, #tpu.memory_space<vmem>>, vector<16x128xf32>
    %cst_21 = arith.constant dense<0.000000e+00> : vector<16x128xf32>
    %17 = tpu.matmul %15, %16, %cst_21 {dimension_numbers = #tpu.dot_dimension_numbers<[1], [0], [0], [1], [0, 0, 1, 1], [], []>} : vector<16x16xf32>, vector<16x128xf32>, vector<16x128xf32> -> vector<16x128xf32>
    %c0_22 = arith.constant 0 : index
    %c0_23 = arith.constant 0 : index
    %18 = vector.load %arg7[%c0_22, %c0_23] : memref<8x128xf32, #tpu.memory_space<vmem>>, vector<8x128xf32>
    %cst_24 = arith.constant dense<0.000000e+00> : vector<16x128xf32>
    %19 = tpu.matmul %1, %18, %cst_24 {dimension_numbers = #tpu.dot_dimension_numbers<[1], [0], [0], [1], [0, 0, 1, 1], [], []>} : vector<16x8xf32>, vector<8x128xf32>, vector<16x128xf32> -> vector<16x128xf32>
    %20 = arith.addf %17, %19 : vector<16x128xf32>
    %c0_25 = arith.constant 0 : index
    %c0_26 = arith.constant 0 : index
    %21 = vector.load %arg8[%c0_25, %c0_26] : memref<1x128xf32, #tpu.memory_space<vmem>>, vector<1x128xf32>
    %22 = vector.broadcast %21 : vector<1x128xf32> to vector<16x128xf32>
    %23 = arith.addf %20, %22 : vector<16x128xf32>
    %cst_27 = arith.constant 0.000000e+00 : f32
    %24 = vector.broadcast %cst_27 : f32 to vector<16x128xf32>
    %25 = arith.maximumf %23, %24 : vector<16x128xf32>
    %26 = arith.truncf %25 : vector<16x128xf32> to vector<16x128xbf16>
    %cst_28 = arith.constant dense<0.000000e+00> : vector<8x128xf32>
    %27 = tpu.matmul %5, %26, %cst_28 {dimension_numbers = #tpu.dot_dimension_numbers<[1], [0], [0], [1], [0, 0, 1, 1], [], []>} : vector<8x16xbf16>, vector<16x128xbf16>, vector<8x128xf32> -> vector<8x128xf32>
    %28 = arith.truncf %27 : vector<8x128xf32> to vector<8x128xbf16>
    %cst_29 = arith.constant dense<0.000000e+00> : vector<16x128xf32>
    %29 = tpu.matmul %3, %28, %cst_29 {dimension_numbers = #tpu.dot_dimension_numbers<[1], [0], [0], [1], [0, 0, 1, 1], [], []>} : vector<16x8xbf16>, vector<8x128xbf16>, vector<16x128xf32> -> vector<16x128xf32>
    %30 = arith.subf %29, %25 : vector<16x128xf32>
    %cst_30 = arith.constant dense<0.000000e+00> : vector<16x128xf32>
    %31 = tpu.matmul %30, %6, %cst_30 {dimension_numbers = #tpu.dot_dimension_numbers<[1], [0], [0], [1], [0, 0, 1, 1], [], []>} : vector<16x128xf32>, vector<128x128xf32>, vector<16x128xf32> -> vector<16x128xf32>
    %32 = arith.addf %31, %10 : vector<16x128xf32>
    %cst_31 = arith.constant 0.000000e+00 : f32
    %33 = vector.broadcast %cst_31 : f32 to vector<16x128xf32>
    %34 = arith.maximumf %32, %33 : vector<16x128xf32>
    %cst_32 = arith.constant dense<0.000000e+00> : vector<16x128xf32>
    %35 = tpu.matmul %34, %7, %cst_32 {dimension_numbers = #tpu.dot_dimension_numbers<[1], [0], [0], [1], [0, 0, 1, 1], [], []>} : vector<16x128xf32>, vector<128x128xf32>, vector<16x128xf32> -> vector<16x128xf32>
    %36 = arith.addf %35, %13 : vector<16x128xf32>
    %37 = arith.addf %25, %36 : vector<16x128xf32>
    %cst_33 = arith.constant 0.000000e+00 : f32
    %38 = vector.broadcast %cst_33 : f32 to vector<16x128xf32>
    %39 = arith.maximumf %37, %38 : vector<16x128xf32>
    %40 = arith.truncf %39 : vector<16x128xf32> to vector<16x128xbf16>
    %cst_34 = arith.constant dense<0.000000e+00> : vector<8x128xf32>
    %41 = tpu.matmul %5, %40, %cst_34 {dimension_numbers = #tpu.dot_dimension_numbers<[1], [0], [0], [1], [0, 0, 1, 1], [], []>} : vector<8x16xbf16>, vector<16x128xbf16>, vector<8x128xf32> -> vector<8x128xf32>
    %42 = arith.truncf %41 : vector<8x128xf32> to vector<8x128xbf16>
    %cst_35 = arith.constant dense<0.000000e+00> : vector<16x128xf32>
    %43 = tpu.matmul %3, %42, %cst_35 {dimension_numbers = #tpu.dot_dimension_numbers<[1], [0], [0], [1], [0, 0, 1, 1], [], []>} : vector<16x8xbf16>, vector<8x128xbf16>, vector<16x128xf32> -> vector<16x128xf32>
    %44 = arith.subf %43, %39 : vector<16x128xf32>
    %cst_36 = arith.constant dense<0.000000e+00> : vector<16x128xf32>
    %45 = tpu.matmul %44, %6, %cst_36 {dimension_numbers = #tpu.dot_dimension_numbers<[1], [0], [0], [1], [0, 0, 1, 1], [], []>} : vector<16x128xf32>, vector<128x128xf32>, vector<16x128xf32> -> vector<16x128xf32>
    %46 = arith.addf %45, %10 : vector<16x128xf32>
    %cst_37 = arith.constant 0.000000e+00 : f32
    %47 = vector.broadcast %cst_37 : f32 to vector<16x128xf32>
    %48 = arith.maximumf %46, %47 : vector<16x128xf32>
    %cst_38 = arith.constant dense<0.000000e+00> : vector<16x128xf32>
    %49 = tpu.matmul %48, %7, %cst_38 {dimension_numbers = #tpu.dot_dimension_numbers<[1], [0], [0], [1], [0, 0, 1, 1], [], []>} : vector<16x128xf32>, vector<128x128xf32>, vector<16x128xf32> -> vector<16x128xf32>
    %50 = arith.addf %49, %13 : vector<16x128xf32>
    %51 = arith.addf %25, %50 : vector<16x128xf32>
    %cst_39 = arith.constant 0.000000e+00 : f32
    %52 = vector.broadcast %cst_39 : f32 to vector<16x128xf32>
    %53 = arith.maximumf %51, %52 : vector<16x128xf32>
    %54 = arith.truncf %53 : vector<16x128xf32> to vector<16x128xbf16>
    %cst_40 = arith.constant dense<0.000000e+00> : vector<8x128xf32>
    %55 = tpu.matmul %5, %54, %cst_40 {dimension_numbers = #tpu.dot_dimension_numbers<[1], [0], [0], [1], [0, 0, 1, 1], [], []>} : vector<8x16xbf16>, vector<16x128xbf16>, vector<8x128xf32> -> vector<8x128xf32>
    %56 = arith.truncf %55 : vector<8x128xf32> to vector<8x128xbf16>
    %cst_41 = arith.constant dense<0.000000e+00> : vector<16x128xf32>
    %57 = tpu.matmul %3, %56, %cst_41 {dimension_numbers = #tpu.dot_dimension_numbers<[1], [0], [0], [1], [0, 0, 1, 1], [], []>} : vector<16x8xbf16>, vector<8x128xbf16>, vector<16x128xf32> -> vector<16x128xf32>
    %58 = arith.subf %57, %53 : vector<16x128xf32>
    %cst_42 = arith.constant dense<0.000000e+00> : vector<16x128xf32>
    %59 = tpu.matmul %58, %6, %cst_42 {dimension_numbers = #tpu.dot_dimension_numbers<[1], [0], [0], [1], [0, 0, 1, 1], [], []>} : vector<16x128xf32>, vector<128x128xf32>, vector<16x128xf32> -> vector<16x128xf32>
    %60 = arith.addf %59, %10 : vector<16x128xf32>
    %cst_43 = arith.constant 0.000000e+00 : f32
    %61 = vector.broadcast %cst_43 : f32 to vector<16x128xf32>
    %62 = arith.maximumf %60, %61 : vector<16x128xf32>
    %cst_44 = arith.constant dense<0.000000e+00> : vector<16x128xf32>
    %63 = tpu.matmul %62, %7, %cst_44 {dimension_numbers = #tpu.dot_dimension_numbers<[1], [0], [0], [1], [0, 0, 1, 1], [], []>} : vector<16x128xf32>, vector<128x128xf32>, vector<16x128xf32> -> vector<16x128xf32>
    %64 = arith.addf %63, %13 : vector<16x128xf32>
    %65 = arith.addf %25, %64 : vector<16x128xf32>
    %cst_45 = arith.constant 0.000000e+00 : f32
    %66 = vector.broadcast %cst_45 : f32 to vector<16x128xf32>
    %67 = arith.maximumf %65, %66 : vector<16x128xf32>
    %68 = arith.truncf %67 : vector<16x128xf32> to vector<16x128xbf16>
    %cst_46 = arith.constant dense<0.000000e+00> : vector<8x128xf32>
    %69 = tpu.matmul %4, %68, %cst_46 {dimension_numbers = #tpu.dot_dimension_numbers<[1], [0], [0], [1], [0, 0, 1, 1], [], []>} : vector<8x16xbf16>, vector<16x128xbf16>, vector<8x128xf32> -> vector<8x128xf32>
    %c0_47 = arith.constant 0 : index
    %c0_48 = arith.constant 0 : index
    %70 = vector.load %arg13[%c0_47, %c0_48] : memref<16x128xf32, #tpu.memory_space<vmem>>, vector<16x128xf32>
    %cst_49 = arith.constant dense<0.000000e+00> : vector<8x128xf32>
    %71 = tpu.matmul %0, %70, %cst_49 {dimension_numbers = #tpu.dot_dimension_numbers<[1], [0], [0], [1], [0, 0, 1, 1], [], []>} : vector<8x16xf32>, vector<16x128xf32>, vector<8x128xf32> -> vector<8x128xf32>
    %c0_50 = arith.constant 0 : index
    %c0_51 = arith.constant 0 : index
    %72 = vector.load %arg14[%c0_50, %c0_51] : memref<128x128xf32, #tpu.memory_space<vmem>>, vector<128x128xf32>
    %cst_52 = arith.constant dense<0.000000e+00> : vector<8x128xf32>
    %73 = tpu.matmul %69, %72, %cst_52 {dimension_numbers = #tpu.dot_dimension_numbers<[1], [0], [0], [1], [0, 0, 1, 1], [], []>} : vector<8x128xf32>, vector<128x128xf32>, vector<8x128xf32> -> vector<8x128xf32>
    %74 = arith.addf %71, %73 : vector<8x128xf32>
    %c0_53 = arith.constant 0 : index
    %c0_54 = arith.constant 0 : index
    %75 = vector.load %arg15[%c0_53, %c0_54] : memref<1x128xf32, #tpu.memory_space<vmem>>, vector<1x128xf32>
    %76 = vector.broadcast %75 : vector<1x128xf32> to vector<8x128xf32>
    %77 = arith.addf %74, %76 : vector<8x128xf32>
    %cst_55 = arith.constant 0.000000e+00 : f32
    %78 = vector.broadcast %cst_55 : f32 to vector<8x128xf32>
    %79 = arith.maximumf %77, %78 : vector<8x128xf32>
    %80 = tpu.iota {dimensions = array<i32: 1>} : vector<1x128xi32>
    %c32_i32 = arith.constant 32 : i32
    %81 = vector.broadcast %c32_i32 : i32 to vector<1x128xi32>
    %82 = arith.cmpi slt, %80, %81 : vector<1x128xi32>
    %83 = arith.extui %82 : vector<1x128xi1> to vector<1x128xi32>
    %84 = arith.sitofp %83 : vector<1x128xi32> to vector<1x128xf32>
    %cst_56 = arith.constant dense<0.000000e+00> : vector<8xf32>
    %85 = vector.multi_reduction <add>, %79, %cst_56 [1] : vector<8x128xf32> to vector<8xf32>
    %86 = vector.shape_cast %85 : vector<8xf32> to vector<8x1xf32>
    %cst_57 = arith.constant 3.125000e-02 : f32
    %87 = vector.broadcast %cst_57 : f32 to vector<8x1xf32>
    %88 = arith.mulf %86, %87 : vector<8x1xf32>
    %89 = vector.broadcast %88 : vector<8x1xf32> to vector<8x128xf32>
    %90 = arith.subf %79, %89 : vector<8x128xf32>
    %91 = vector.broadcast %84 : vector<1x128xf32> to vector<8x128xf32>
    %92 = arith.mulf %90, %91 : vector<8x128xf32>
    %93 = arith.mulf %92, %92 : vector<8x128xf32>
    %cst_58 = arith.constant dense<0.000000e+00> : vector<8xf32>
    %94 = vector.multi_reduction <add>, %93, %cst_58 [1] : vector<8x128xf32> to vector<8xf32>
    %95 = vector.shape_cast %94 : vector<8xf32> to vector<8x1xf32>
    %cst_59 = arith.constant 3.125000e-02 : f32
    %96 = vector.broadcast %cst_59 : f32 to vector<8x1xf32>
    %97 = arith.mulf %95, %96 : vector<8x1xf32>
    %cst_60 = arith.constant 9.99999974E-6 : f32
    %98 = vector.broadcast %cst_60 : f32 to vector<8x1xf32>
    %99 = arith.addf %97, %98 : vector<8x1xf32>
    %100 = math.rsqrt %99 : vector<8x1xf32>
    %101 = vector.broadcast %100 : vector<8x1xf32> to vector<8x128xf32>
    %102 = arith.mulf %92, %101 : vector<8x128xf32>
    %c0_61 = arith.constant 0 : index
    %c0_62 = arith.constant 0 : index
    %103 = vector.load %arg16[%c0_61, %c0_62] : memref<1x128xf32, #tpu.memory_space<vmem>>, vector<1x128xf32>
    %104 = vector.broadcast %103 : vector<1x128xf32> to vector<8x128xf32>
    %105 = arith.mulf %102, %104 : vector<8x128xf32>
    %c0_63 = arith.constant 0 : index
    %c0_64 = arith.constant 0 : index
    %106 = vector.load %arg17[%c0_63, %c0_64] : memref<1x128xf32, #tpu.memory_space<vmem>>, vector<1x128xf32>
    %107 = vector.broadcast %106 : vector<1x128xf32> to vector<8x128xf32>
    %108 = arith.addf %105, %107 : vector<8x128xf32>
    %cst_65 = arith.constant 0.000000e+00 : f32
    %109 = vector.broadcast %cst_65 : f32 to vector<8x128xf32>
    %110 = arith.maximumf %108, %109 : vector<8x128xf32>
    %c0_66 = arith.constant 0 : index
    %c0_67 = arith.constant 0 : index
    %111 = vector.load %arg18[%c0_66, %c0_67] : memref<8x128xf32, #tpu.memory_space<vmem>>, vector<8x128xf32>
    tpu.vector_store %arg18[%c0_66, %c0_67], %110 {strides = array<i32>} : memref<8x128xf32, #tpu.memory_space<vmem>>, vector<8x128xf32>,
    return
  }
}

</mosaic_0001>

<llo_original>
// kernel: tpu_custom_call.1
$region0: #{tpu_custom_call.1}
  #allocation0 [shape = 'u32[]', space=smem, size = 0x4, offset = 0x4, fixed_abs, tag = 'smem constant byte address 0x4 - core index']
  #allocation1 [shape = 'u32[72,128]{1,0:T(1,128)}', space=vmem, size = 0x9000, scoped, tag = 'internal scratch']
  %s0 = inlined_call_operand.vmem [shape: f32[8,16], index: 0, kind: input, shape index: {}]
  %s1 = inlined_call_operand.vmem [shape: f32[16,8], index: 1, kind: input, shape index: {}]
  %s2 = inlined_call_operand.vmem [shape: bf16[16,8], index: 2, kind: input, shape index: {}]
  %s3 = inlined_call_operand.vmem [shape: bf16[16,8], index: 3, kind: input, shape index: {}]
  %s4 = inlined_call_operand.hbm [shape: bf16[8,16], index: 4, kind: input, shape index: {}]
  %s5 = inlined_call_operand.vmem [shape: bf16[8,16], index: 5, kind: input, shape index: {}]
  %s6 = inlined_call_operand.vmem [shape: f32[16,128], index: 6, kind: input, shape index: {}]
  %s7 = inlined_call_operand.vmem [shape: f32[8,128], index: 7, kind: input, shape index: {}]
  %s8 = inlined_call_operand.vmem [shape: f32[1,128], index: 8, kind: input, shape index: {}]
  %s9 = inlined_call_operand.hbm [shape: f32[128,128], index: 9, kind: input, shape index: {}]
  %s10 = inlined_call_operand.vmem [shape: f32[1,128], index: 10, kind: input, shape index: {}]
  %s11 = inlined_call_operand.hbm [shape: f32[128,128], index: 11, kind: input, shape index: {}]
  %s12 = inlined_call_operand.vmem [shape: f32[1,128], index: 12, kind: input, shape index: {}]
  %s13 = inlined_call_operand.vmem [shape: f32[16,128], index: 13, kind: input, shape index: {}]
  %s14 = inlined_call_operand.hbm [shape: f32[128,128], index: 14, kind: input, shape index: {}]
  %s15 = inlined_call_operand.vmem [shape: f32[1,128], index: 15, kind: input, shape index: {}]
  %s16 = inlined_call_operand.vmem [shape: f32[1,128], index: 16, kind: input, shape index: {}]
  %s17 = inlined_call_operand.vmem [shape: f32[1,128], index: 17, kind: input, shape index: {}]
  %s18 = inlined_call_operand.hbm [shape: f32[8,128], index: 18, kind: output, shape index: {}]
  %s19 = sld [smem:[#allocation0]]
  $region98: #{tpu_custom_call.1} parent=0
    _
  %s21 = ssub.s32 1, %s19
  %s22 = scalar_select 0, %s21, %s19
  $region1: #{tpu_custom_call.1} parent=0
    #allocation2 [shape = 'u8[2048]{0}', space=vmem, size = 0x800, scoped, tag = 'input window, operand 4, single buffered']
    #allocation3 [shape = 's32[1]{0}', space=sflag, size = 0x4, scoped, tag = 'scoped memory for tpu_custom_call.1']
    #allocation4 [shape = 's32[1]{0}', space=sflag, size = 0x4, scoped, tag = 'scoped memory for tpu_custom_call.1']
    #allocation5 [shape = 'u8[65536]{0}', space=vmem, size = 0x10000, scoped, tag = 'input window, operand 9, single buffered']
    #allocation6 [shape = 's32[1]{0}', space=sflag, size = 0x4, scoped, tag = 'scoped memory for tpu_custom_call.1']
    #allocation7 [shape = 'u8[65536]{0}', space=vmem, size = 0x10000, scoped, tag = 'input window, operand 11, single buffered']
    #allocation8 [shape = 'u8[65536]{0}', space=vmem, size = 0x10000, scoped, tag = 'input window, operand 14, single buffered']
    #allocation9 [shape = 's32[1]{0}', space=sflag, size = 0x4, scoped, tag = 'scoped memory for tpu_custom_call.1']
    #allocation10 [shape = 'u8[4096]{0}', space=vmem, size = 0x1000, scoped, tag = 'output window, operand 0, single buffered']
    %23 = vsyncpa [#allocation3], 0
    %24 = vsyncpa [#allocation6], 0
    %25 = vsyncpa [#allocation9], 0
    %26 = vsyncpa [#allocation4], 0
    // Predicated region
    $region2: #{tpu_custom_call.1} parent=1 // pred_check
      _
    $region3: #{tpu_custom_call.1} parent=1 // pred_check_branch
      %28 = sbr.rel (0) target = $region5
    $region4: #{tpu_custom_call.1} parent=1 // pred_region
      _
    $region5: #{tpu_custom_call.1} parent=1 // pred_fallthru
      _
    // Predicated region
    $region6: #{tpu_custom_call.1} parent=1 // pred_check
      _
    $region7: #{tpu_custom_call.1} parent=1 // pred_check_branch
      %30 = sbr.rel (0) target = $region9
    $region8: #{tpu_custom_call.1} parent=1 // pred_region
      _
    $region9: #{tpu_custom_call.1} parent=1 // pred_fallthru
      _
    // Predicated region
    $region10: #{tpu_custom_call.1} parent=1 // pred_check
      _
    $region11: #{tpu_custom_call.1} parent=1 // pred_check_branch
      %32 = sbr.rel (0) target = $region13
    $region12: #{tpu_custom_call.1} parent=1 // pred_region
      _
    $region13: #{tpu_custom_call.1} parent=1 // pred_fallthru
      _
    // Predicated region
    $region14: #{tpu_custom_call.1} parent=1 // pred_check
      _
    $region15: #{tpu_custom_call.1} parent=1 // pred_check_branch
      %34 = sbr.rel (0) target = $region17
    $region16: #{tpu_custom_call.1} parent=1 // pred_region
      _
    $region17: #{tpu_custom_call.1} parent=1 // pred_fallthru
      _
    // Predicated region
    $region18: #{tpu_custom_call.1} parent=1 // pred_check
      _
    $region19: #{tpu_custom_call.1} parent=1 // pred_check_branch
      %36 = sbr.rel (0) target = $region21
    $region20: #{tpu_custom_call.1} parent=1 // pred_region
      %38 = vsyncadd [#allocation3], 0
      %s40 = sshll.u32 %s4, 4
      %s41 = int_to_ptr.hbm [resolvable:$true] %s40
      %s42 = sshll.u32 [#allocation2], 4
      %s43 = int_to_ptr.vmem [resolvable:$true] %s42
      %45 = dma.hbm_to_vmem [thread:$0]  %s41, 64, %s43, [#allocation3]
    $region21: #{tpu_custom_call.1} parent=1 // pred_fallthru
      _
    // Predicated region
    $region22: #{tpu_custom_call.1} parent=1 // pred_check
      _
    $region23: #{tpu_custom_call.1} parent=1 // pred_check_branch
      %47 = sbr.rel (0) target = $region25
    $region24: #{tpu_custom_call.1} parent=1 // pred_region
      _
    $region25: #{tpu_custom_call.1} parent=1 // pred_fallthru
      _
    // Predicated region
    $region26: #{tpu_custom_call.1} parent=1 // pred_check
      _
    $region27: #{tpu_custom_call.1} parent=1 // pred_check_branch
      %49 = sbr.rel (0) target = $region29
    $region28: #{tpu_custom_call.1} parent=1 // pred_region
      _
    $region29: #{tpu_custom_call.1} parent=1 // pred_fallthru
      _
    // Predicated region
    $region30: #{tpu_custom_call.1} parent=1 // pred_check
      _
    $region31: #{tpu_custom_call.1} parent=1 // pred_check_branch
      %51 = sbr.rel (0) target = $region33
    $region32: #{tpu_custom_call.1} parent=1 // pred_region
      _
    $region33: #{tpu_custom_call.1} parent=1 // pred_fallthru
      _
    // Predicated region
    $region34: #{tpu_custom_call.1} parent=1 // pred_check
      _
    $region35: #{tpu_custom_call.1} parent=1 // pred_check_branch
      %53 = sbr.rel (0) target = $region37
    $region36: #{tpu_custom_call.1} parent=1 // pred_region
      _
    $region37: #{tpu_custom_call.1} parent=1 // pred_fallthru
      _
    // Predicated region
    $region38: #{tpu_custom_call.1} parent=1 // pred_check
      _
    $region39: #{tpu_custom_call.1} parent=1 // pred_check_branch
      %55 = sbr.rel (0) target = $region41
    $region40: #{tpu_custom_call.1} parent=1 // pred_region
      %57 = vsyncadd [#allocation6], 0
      %s58 = sshll.u32 %s9, 4
      %s59 = int_to_ptr.hbm [resolvable:$true] %s58
      %s60 = sshll.u32 [#allocation5], 4
      %s61 = int_to_ptr.vmem [resolvable:$true] %s60
      %66 = dma.hbm_to_vmem [thread:$0]  %s59, 2048, %s61, [#allocation6], 128, 128, 8
    $region41: #{tpu_custom_call.1} parent=1 // pred_fallthru
      _
    // Predicated region
    $region42: #{tpu_custom_call.1} parent=1 // pred_check
      _
    $region43: #{tpu_custom_call.1} parent=1 // pred_check_branch
      %68 = sbr.rel (0) target = $region45
    $region44: #{tpu_custom_call.1} parent=1 // pred_region
      _
    $region45: #{tpu_custom_call.1} parent=1 // pred_fallthru
      _
    // Predicated region
    $region46: #{tpu_custom_call.1} parent=1 // pred_check
      _
    $region47: #{tpu_custom_call.1} parent=1 // pred_check_branch
      %70 = sbr.rel (0) target = $region49
    $region48: #{tpu_custom_call.1} parent=1 // pred_region
      %72 = vsyncadd [#allocation6], 0
      %s73 = sshll.u32 %s11, 4
      %s74 = int_to_ptr.hbm [resolvable:$true] %s73
      %s75 = sshll.u32 [#allocation7], 4
      %s76 = int_to_ptr.vmem [resolvable:$true] %s75
      %81 = dma.hbm_to_vmem [thread:$0]  %s74, 2048, %s76, [#allocation6], 128, 128, 8
    $region49: #{tpu_custom_call.1} parent=1 // pred_fallthru
      _
    // Predicated region
    $region50: #{tpu_custom_call.1} parent=1 // pred_check
      _
    $region51: #{tpu_custom_call.1} parent=1 // pred_check_branch
      %83 = sbr.rel (0) target = $region53
    $region52: #{tpu_custom_call.1} parent=1 // pred_region
      _
    $region53: #{tpu_custom_call.1} parent=1 // pred_fallthru
      _
    // Predicated region
    $region54: #{tpu_custom_call.1} parent=1 // pred_check
      _
    $region55: #{tpu_custom_call.1} parent=1 // pred_check_branch
      %85 = sbr.rel (0) target = $region57
    $region56: #{tpu_custom_call.1} parent=1 // pred_region
      _
    $region57: #{tpu_custom_call.1} parent=1 // pred_fallthru
      _
    // Predicated region
    $region58: #{tpu_custom_call.1} parent=1 // pred_check
      _
    $region59: #{tpu_custom_call.1} parent=1 // pred_check_branch
      %87 = sbr.rel (0) target = $region61
    $region60: #{tpu_custom_call.1} parent=1 // pred_region
      %89 = vsyncadd [#allocation9], 0
      %s90 = sshll.u32 %s14, 4
      %s91 = int_to_ptr.hbm [resolvable:$true] %s90
      %s92 = sshll.u32 [#allocation8], 4
      %s93 = int_to_ptr.vmem [resolvable:$true] %s92
      %98 = dma.hbm_to_vmem [thread:$0]  %s91, 2048, %s93, [#allocation9], 128, 128, 8
    $region61: #{tpu_custom_call.1} parent=1 // pred_fallthru
      _
    // Predicated region
    $region62: #{tpu_custom_call.1} parent=1 // pred_check
      _
    $region63: #{tpu_custom_call.1} parent=1 // pred_check_branch
      %100 = sbr.rel (0) target = $region65
    $region64: #{tpu_custom_call.1} parent=1 // pred_region
      _
    $region65: #{tpu_custom_call.1} parent=1 // pred_fallthru
      _
    // Predicated region
    $region66: #{tpu_custom_call.1} parent=1 // pred_check
      _
    $region67: #{tpu_custom_call.1} parent=1 // pred_check_branch
      %102 = sbr.rel (0) target = $region69
    $region68: #{tpu_custom_call.1} parent=1 // pred_region
      _
    $region69: #{tpu_custom_call.1} parent=1 // pred_fallthru
      _
    // Predicated region
    $region70: #{tpu_custom_call.1} parent=1 // pred_check
      _
    $region71: #{tpu_custom_call.1} parent=1 // pred_check_branch
      %104 = sbr.rel (0) target = $region73
    $region72: #{tpu_custom_call.1} parent=1 // pred_region
      _
    $region73: #{tpu_custom_call.1} parent=1 // pred_fallthru
      _
    // Predicated region
    $region74: #{tpu_custom_call.1} parent=1 // pred_check
      _
    $region75: #{tpu_custom_call.1} parent=1 // pred_check_branch
      %106 = sbr.rel (0) target = $region77
    $region76: #{tpu_custom_call.1} parent=1 // pred_region
      %108 = dma.done [#allocation3], 64
    $region77: #{tpu_custom_call.1} parent=1 // pred_fallthru
      _
    // Predicated region
    $region78: #{tpu_custom_call.1} parent=1 // pred_check
      _
    $region79: #{tpu_custom_call.1} parent=1 // pred_check_branch
      %110 = sbr.rel (0) target = $region81
    $region80: #{tpu_custom_call.1} parent=1 // pred_region
      %112 = dma.done [#allocation6], 2048
    $region81: #{tpu_custom_call.1} parent=1 // pred_fallthru
      _
    // Predicated region
    $region82: #{tpu_custom_call.1} parent=1 // pred_check
      _
    $region83: #{tpu_custom_call.1} parent=1 // pred_check_branch
      %114 = sbr.rel (0) target = $region85
    $region84: #{tpu_custom_call.1} parent=1 // pred_region
      %116 = dma.done [#allocation6], 2048
    $region85: #{tpu_custom_call.1} parent=1 // pred_fallthru
      _
    // Predicated region
    $region86: #{tpu_custom_call.1} parent=1 // pred_check
      _
    $region87: #{tpu_custom_call.1} parent=1 // pred_check_branch
      %118 = sbr.rel (0) target = $region89
    $region88: #{tpu_custom_call.1} parent=1 // pred_region
      %120 = dma.done [#allocation9], 2048
    $region89: #{tpu_custom_call.1} parent=1 // pred_fallthru
      _
    %v122 = vld [vmem:[%s0] sm:$0xff]
    %v123 = vld [vmem:[%s1] sm:$0xff]
    %v124 = vld [vmem:[%s1 + $0x8] sm:$0xff]
    %v125 = vld [vmem:[%s2] sm:$0xf]
    %v126 = vld [vmem:[%s2 + $0x4] sm:$0xf]
    %v127 = vld [vmem:[%s3] sm:$0xf]
    %v128 = vld [vmem:[%s3 + $0x4] sm:$0xf]
    %v129 = vld [vmem:[#allocation2] sm:$0xf]
    %v130 = vld [vmem:[%s5] sm:$0xf]
    %v131 = vld [vmem:[#allocation5] sm:$0xff]
    %v132 = vld [vmem:[#allocation5 + $0x8] sm:$0xff]
    %v133 = vld [vmem:[#allocation5 + $0x10] sm:$0xff]
    %v134 = vld [vmem:[#allocation5 + $0x18] sm:$0xff]
    %v135 = vld [vmem:[#allocation5 + $0x20] sm:$0xff]
    %v136 = vld [vmem:[#allocation5 + $0x28] sm:$0xff]
    %v137 = vld [vmem:[#allocation5 + $0x30] sm:$0xff]
    %v138 = vld [vmem:[#allocation5 + $0x38] sm:$0xff]
    %v139 = vld [vmem:[#allocation5 + $0x40] sm:$0xff]
    %v140 = vld [vmem:[#allocation5 + $0x48] sm:$0xff]
    %v141 = vld [vmem:[#allocation5 + $0x50] sm:$0xff]
    %v142 = vld [vmem:[#allocation5 + $0x58] sm:$0xff]
    %v143 = vld [vmem:[#allocation5 + $0x60] sm:$0xff]
    %v144 = vld [vmem:[#allocation5 + $0x68] sm:$0xff]
    %v145 = vld [vmem:[#allocation5 + $0x70] sm:$0xff]
    %v146 = vld [vmem:[#allocation5 + $0x78] sm:$0xff]
    %v147 = vld [vmem:[#allocation7] sm:$0xff]
    %v148 = vld [vmem:[#allocation7 + $0x8] sm:$0xff]
    %v149 = vld [vmem:[#allocation7 + $0x10] sm:$0xff]
    %v150 = vld [vmem:[#allocation7 + $0x18] sm:$0xff]
    %v151 = vld [vmem:[#allocation7 + $0x20] sm:$0xff]
    %v152 = vld [vmem:[#allocation7 + $0x28] sm:$0xff]
    %v153 = vld [vmem:[#allocation7 + $0x30] sm:$0xff]
    %v154 = vld [vmem:[#allocation7 + $0x38] sm:$0xff]
    %v155 = vld [vmem:[#allocation7 + $0x40] sm:$0xff]
    %v156 = vld [vmem:[#allocation7 + $0x48] sm:$0xff]
    %v157 = vld [vmem:[#allocation7 + $0x50] sm:$0xff]
    %v158 = vld [vmem:[#allocation7 + $0x58] sm:$0xff]
    %v159 = vld [vmem:[#allocation7 + $0x60] sm:$0xff]
    %v160 = vld [vmem:[#allocation7 + $0x68] sm:$0xff]
    %v161 = vld [vmem:[#allocation7 + $0x70] sm:$0xff]
    %v162 = vld [vmem:[#allocation7 + $0x78] sm:$0xff]
    %v163 = vld [vmem:[%s10] sm:$0x1]
    %v165 = vperm.slane %v163, 0
    %v167 = vld [vmem:[%s12] sm:$0x1]
    %v169 = vperm.slane %v167, 0
    %v171 = vpack.c.bf16 %v122, %v122
    %v174 = vunpack.c.l.b16 %v125
    %v175 = vunpack.c.l.b16 %v126
    %v176 = vpack.c.b16 %v175, %v174
    %vm177 = vcmask 64512
    %v179 = vsel %vm177, %v176, 0
    %vm181 = vcmask 1043456
    %v183 = vsel %vm181, %v171, 0
    %185 = vmatpush.bf16.msra.mxu0 0
    %186 = vmatpush.bf16.msra.mxu0 0
    %187 = vmatpush.bf16.msra.mxu0 0
    %188 = vmatpush.bf16.msra.mxu0 0
    %189 = vmatpush.bf16.msra.mxu0 0
    %190 = vmatpush.bf16.msra.mxu0 0
    %191 = vmatpush.bf16.msra.mxu0 0
    %192 = vmatpush.bf16.msra.mxu0 %v183
    %193 = vmatmul.bf16.gmra.mxu0 %v179
    %v194 = vpop.f32.mrf.mxu0
    %v195 = vadd.f32 0.0, %v194
    %v196 = vpop.f32.mrf.mxu0
    %v197 = vadd.f32 0.0, %v196
    %198 = vdwg.mxu0
    %v199 = vld [vmem:[%s6] sm:$0xff]
    %v200 = vld [vmem:[%s6 + $0x8] sm:$0xff]
    %v201 = vld [vmem:[%s7] sm:$0xff]
    %v203 = vsel %vm177, %v123, 0
    %v206 = vsel %vm177, %v124, 0
    %208 = vmatpush.msra.mxu0 0.0
    %209 = vmatpush.msra.mxu0 0.0
    %210 = vmatpush.msra.mxu0 0.0
    %211 = vmatpush.msra.mxu0 0.0
    %212 = vmatpush.msra.mxu0 0.0
    %213 = vmatpush.msra.mxu0 0.0
    %214 = vmatpush.msra.mxu0 0.0
    %215 = vmatpush.msra.mxu0 0.0
    %216 = vmatpush.msra.mxu0 0.0
    %217 = vmatpush.msra.mxu0 0.0
    %218 = vmatpush.msra.mxu0 0.0
    %219 = vmatpush.msra.mxu0 0.0
    %220 = vmatpush.msra.mxu0 0.0
    %221 = vmatpush.msra.mxu0 0.0
    %222 = vmatpush.msra.mxu0 0.0
    %223 = vmatpush.msra.mxu0 %v201
    %224 = vmatmul.f32.gmra.mxu0 %v203
    %v225 = vpop.f32.mrf.mxu0
    %v226 = vadd.f32 0.0, %v225
    %227 = vmatmul.f32.gmra.mxu0 %v206
    %v228 = vpop.f32.mrf.mxu0
    %v229 = vadd.f32 0.0, %v228
    %230 = vdwg.mxu0
    %vm231 = vcmask 130048
    %v233 = vsel %vm231, %v195, 0
    %v236 = vsel %vm231, %v197, 0
    %238 = vmatpush.msra.mxu0 0.0
    %239 = vmatpush.msra.mxu0 0.0
    %240 = vmatpush.msra.mxu0 0.0
    %241 = vmatpush.msra.mxu0 0.0
    %242 = vmatpush.msra.mxu0 0.0
    %243 = vmatpush.msra.mxu0 0.0
    %244 = vmatpush.msra.mxu0 0.0
    %245 = vmatpush.msra.mxu0 0.0
    %246 = vmatpush.msra.mxu0 0.0
    %247 = vmatpush.msra.mxu0 0.0
    %248 = vmatpush.msra.mxu0 0.0
    %249 = vmatpush.msra.mxu0 0.0
    %250 = vmatpush.msra.mxu0 0.0
    %251 = vmatpush.msra.mxu0 0.0
    %252 = vmatpush.msra.mxu0 %v200
    %253 = vmatpush.msra.mxu0 %v199
    %254 = vmatmul.f32.gmra.mxu0 %v233
    %v255 = vpop.f32.mrf.mxu0
    %v256 = vadd.f32 %v226, %v255
    %257 = vmatmul.f32.gmra.mxu0 %v236
    %v258 = vpop.f32.mrf.mxu0
    %v259 = vadd.f32 %v229, %v258
    %260 = vdwg.mxu0
    %v261 = vld [vmem:[%s8] sm:$0x1]
    %v263 = vperm.slane %v261, 0
    %v265 = vadd.f32 %v256, %v263
    %v266 = vadd.f32 %v259, %v263
    %v267 = vmax.f32 %v265, 0.0
    %v268 = vmax.f32 %v266, 0.0
    %v269 = vpack.c.bf16 %v268, %v267
    %v271 = vsel %vm231, %v130, 0
    %273 = vmatpush.bf16.msra.mxu0 0
    %274 = vmatpush.bf16.msra.mxu0 0
    %275 = vmatpush.bf16.msra.mxu0 0
    %276 = vmatpush.bf16.msra.mxu0 0
    %277 = vmatpush.bf16.msra.mxu0 0
    %278 = vmatpush.bf16.msra.mxu0 0
    %279 = vmatpush.bf16.msra.mxu0 0
    %280 = vmatpush.bf16.msra.mxu0 %v269
    %281 = vmatmul.bf16.gmra.mxu0 %v271
    %v282 = vpop.f32.mrf.mxu0
    %v283 = vadd.f32 0.0, %v282
    %v284 = vpop.f32.mrf.mxu0
    %285 = vdwg.mxu0
    %v286 = vpack.c.bf16 %v283, %v283
    %v289 = vunpack.c.l.b16 %v127
    %v290 = vunpack.c.l.b16 %v128
    %v291 = vpack.c.b16 %v290, %v289
    %v293 = vsel %vm177, %v291, 0
    %v296 = vsel %vm181, %v286, 0
    %298 = vmatpush.bf16.msra.mxu0 0
    %299 = vmatpush.bf16.msra.mxu0 0
    %300 = vmatpush.bf16.msra.mxu0 0
    %301 = vmatpush.bf16.msra.mxu0 0
    %302 = vmatpush.bf16.msra.mxu0 0
    %303 = vmatpush.bf16.msra.mxu0 0
    %304 = vmatpush.bf16.msra.mxu0 0
    %305 = vmatpush.bf16.msra.mxu0 %v296
    %306 = vmatmul.bf16.gmra.mxu0 %v293
    %v307 = vpop.f32.mrf.mxu0
    %v308 = vadd.f32 0.0, %v307
    %v309 = vpop.f32.mrf.mxu0
    %v310 = vadd.f32 0.0, %v309
    %311 = vdwg.mxu0
    %v312 = vsub.f32 %v308, %v267
    %v313 = vsub.f32 %v310, %v268
    %314 = vmatpush.msra.mxu0 %v146
    %315 = vmatpush.msra.mxu0 %v145
    %316 = vmatpush.msra.mxu0 %v144
    %317 = vmatpush.msra.mxu0 %v143
    %318 = vmatpush.msra.mxu0 %v142
    %319 = vmatpush.msra.mxu0 %v141
    %320 = vmatpush.msra.mxu0 %v140
    %321 = vmatpush.msra.mxu0 %v139
    %322 = vmatpush.msra.mxu0 %v138
    %323 = vmatpush.msra.mxu0 %v137
    %324 = vmatpush.msra.mxu0 %v136
    %325 = vmatpush.msra.mxu0 %v135
    %326 = vmatpush.msra.mxu0 %v134
    %327 = vmatpush.msra.mxu0 %v133
    %328 = vmatpush.msra.mxu0 %v132
    %329 = vmatpush.msra.mxu0 %v131
    %330 = vmatmul.f32.gmra.mxu0 %v312
    %v331 = vpop.f32.mrf.mxu0
    %v332 = vadd.f32 %v165, %v331
    %333 = vmatmul.f32.gmra.mxu0 %v313
    %v334 = vpop.f32.mrf.mxu0
    %v335 = vadd.f32 %v165, %v334
    %336 = vdwg.mxu0
    %v337 = vmax.f32 %v332, 0.0
    %v338 = vmax.f32 %v335, 0.0
    %339 = vmatpush.msra.mxu0 %v162
    %340 = vmatpush.msra.mxu0 %v161
    %341 = vmatpush.msra.mxu0 %v160
    %342 = vmatpush.msra.mxu0 %v159
    %343 = vmatpush.msra.mxu0 %v158
    %344 = vmatpush.msra.mxu0 %v157
    %345 = vmatpush.msra.mxu0 %v156
    %346 = vmatpush.msra.mxu0 %v155
    %347 = vmatpush.msra.mxu0 %v154
    %348 = vmatpush.msra.mxu0 %v153
    %349 = vmatpush.msra.mxu0 %v152
    %350 = vmatpush.msra.mxu0 %v151
    %351 = vmatpush.msra.mxu0 %v150
    %352 = vmatpush.msra.mxu0 %v149
    %353 = vmatpush.msra.mxu0 %v148
    %354 = vmatpush.msra.mxu0 %v147
    %355 = vmatmul.f32.gmra.mxu0 %v337
    %v356 = vpop.f32.mrf.mxu0
    %v357 = vadd.f32 %v169, %v356
    %358 = vmatmul.f32.gmra.mxu0 %v338
    %v359 = vpop.f32.mrf.mxu0
    %v360 = vadd.f32 %v169, %v359
    %361 = vdwg.mxu0
    %v362 = vadd.f32 %v267, %v357
    %v363 = vadd.f32 %v268, %v360
    %v364 = vmax.f32 %v362, 0.0
    %v365 = vmax.f32 %v363, 0.0
    %v366 = vpack.c.bf16 %v365, %v364
    %367 = vmatpush.bf16.msra.mxu0 0
    %368 = vmatpush.bf16.msra.mxu0 0
    %369 = vmatpush.bf16.msra.mxu0 0
    %370 = vmatpush.bf16.msra.mxu0 0
    %371 = vmatpush.bf16.msra.mxu0 0
    %372 = vmatpush.bf16.msra.mxu0 0
    %373 = vmatpush.bf16.msra.mxu0 0
    %374 = vmatpush.bf16.msra.mxu0 %v366
    %375 = vmatmul.bf16.gmra.mxu0 %v271
    %v376 = vpop.f32.mrf.mxu0
    %v377 = vadd.f32 0.0, %v376
    %v378 = vpop.f32.mrf.mxu0
    %379 = vdwg.mxu0
    %v380 = vpack.c.bf16 %v377, %v377
    %v382 = vsel %vm181, %v380, 0
    %384 = vmatpush.bf16.msra.mxu0 0
    %385 = vmatpush.bf16.msra.mxu0 0
    %386 = vmatpush.bf16.msra.mxu0 0
    %387 = vmatpush.bf16.msra.mxu0 0
    %388 = vmatpush.bf16.msra.mxu0 0
    %389 = vmatpush.bf16.msra.mxu0 0
    %390 = vmatpush.bf16.msra.mxu0 0
    %391 = vmatpush.bf16.msra.mxu0 %v382
    %392 = vmatmul.bf16.gmra.mxu0 %v293
    %v393 = vpop.f32.mrf.mxu0
    %v394 = vadd.f32 0.0, %v393
    %v395 = vpop.f32.mrf.mxu0
    %v396 = vadd.f32 0.0, %v395
    %397 = vdwg.mxu0
    %v398 = vsub.f32 %v394, %v364
    %v399 = vsub.f32 %v396, %v365
    %400 = vmatpush.msra.mxu0 %v146
    %401 = vmatpush.msra.mxu0 %v145
    %402 = vmatpush.msra.mxu0 %v144
    %403 = vmatpush.msra.mxu0 %v143
    %404 = vmatpush.msra.mxu0 %v142
    %405 = vmatpush.msra.mxu0 %v141
    %406 = vmatpush.msra.mxu0 %v140
    %407 = vmatpush.msra.mxu0 %v139
    %408 = vmatpush.msra.mxu0 %v138
    %409 = vmatpush.msra.mxu0 %v137
    %410 = vmatpush.msra.mxu0 %v136
    %411 = vmatpush.msra.mxu0 %v135
    %412 = vmatpush.msra.mxu0 %v134
    %413 = vmatpush.msra.mxu0 %v133
    %414 = vmatpush.msra.mxu0 %v132
    %415 = vmatpush.msra.mxu0 %v131
    %416 = vmatmul.f32.gmra.mxu0 %v398
    %v417 = vpop.f32.mrf.mxu0
    %v418 = vadd.f32 %v165, %v417
    %419 = vmatmul.f32.gmra.mxu0 %v399
    %v420 = vpop.f32.mrf.mxu0
    %v421 = vadd.f32 %v165, %v420
    %422 = vdwg.mxu0
    %v423 = vmax.f32 %v418, 0.0
    %v424 = vmax.f32 %v421, 0.0
    %425 = vmatpush.msra.mxu0 %v162
    %426 = vmatpush.msra.mxu0 %v161
    %427 = vmatpush.msra.mxu0 %v160
    %428 = vmatpush.msra.mxu0 %v159
    %429 = vmatpush.msra.mxu0 %v158
    %430 = vmatpush.msra.mxu0 %v157
    %431 = vmatpush.msra.mxu0 %v156
    %432 = vmatpush.msra.mxu0 %v155
    %433 = vmatpush.msra.mxu0 %v154
    %434 = vmatpush.msra.mxu0 %v153
    %435 = vmatpush.msra.mxu0 %v152
    %436 = vmatpush.msra.mxu0 %v151
    %437 = vmatpush.msra.mxu0 %v150
    %438 = vmatpush.msra.mxu0 %v149
    %439 = vmatpush.msra.mxu0 %v148
    %440 = vmatpush.msra.mxu0 %v147
    %441 = vmatmul.f32.gmra.mxu0 %v423
    %v442 = vpop.f32.mrf.mxu0
    %v443 = vadd.f32 %v169, %v442
    %444 = vmatmul.f32.gmra.mxu0 %v424
    %v445 = vpop.f32.mrf.mxu0
    %v446 = vadd.f32 %v169, %v445
    %447 = vdwg.mxu0
    %v448 = vadd.f32 %v267, %v443
    %v449 = vadd.f32 %v268, %v446
    %v450 = vmax.f32 %v448, 0.0
    %v451 = vmax.f32 %v449, 0.0
    %v452 = vpack.c.bf16 %v451, %v450
    %453 = vmatpush.bf16.msra.mxu0 0
    %454 = vmatpush.bf16.msra.mxu0 0
    %455 = vmatpush.bf16.msra.mxu0 0
    %456 = vmatpush.bf16.msra.mxu0 0
    %457 = vmatpush.bf16.msra.mxu0 0
    %458 = vmatpush.bf16.msra.mxu0 0
    %459 = vmatpush.bf16.msra.mxu0 0
    %460 = vmatpush.bf16.msra.mxu0 %v452
    %461 = vmatmul.bf16.gmra.mxu0 %v271
    %v462 = vpop.f32.mrf.mxu0
    %v463 = vadd.f32 0.0, %v462
    %v464 = vpop.f32.mrf.mxu0
    %465 = vdwg.mxu0
    %v466 = vpack.c.bf16 %v463, %v463
    %v468 = vsel %vm181, %v466, 0
    %470 = vmatpush.bf16.msra.mxu0 0
    %471 = vmatpush.bf16.msra.mxu0 0
    %472 = vmatpush.bf16.msra.mxu0 0
    %473 = vmatpush.bf16.msra.mxu0 0
    %474 = vmatpush.bf16.msra.mxu0 0
    %475 = vmatpush.bf16.msra.mxu0 0
    %476 = vmatpush.bf16.msra.mxu0 0
    %477 = vmatpush.bf16.msra.mxu0 %v468
    %478 = vmatmul.bf16.gmra.mxu0 %v293
    %v479 = vpop.f32.mrf.mxu0
    %v480 = vadd.f32 0.0, %v479
    %v481 = vpop.f32.mrf.mxu0
    %v482 = vadd.f32 0.0, %v481
    %483 = vdwg.mxu0
    %v484 = vsub.f32 %v480, %v450
    %v485 = vsub.f32 %v482, %v451
    %486 = vmatpush.msra.mxu0 %v146
    %487 = vmatpush.msra.mxu0 %v145
    %488 = vmatpush.msra.mxu0 %v144
    %489 = vmatpush.msra.mxu0 %v143
    %490 = vmatpush.msra.mxu0 %v142
    %491 = vmatpush.msra.mxu0 %v141
    %492 = vmatpush.msra.mxu0 %v140
    %493 = vmatpush.msra.mxu0 %v139
    %494 = vmatpush.msra.mxu0 %v138
    %495 = vmatpush.msra.mxu0 %v137
    %496 = vmatpush.msra.mxu0 %v136
    %497 = vmatpush.msra.mxu0 %v135
    %498 = vmatpush.msra.mxu0 %v134
    %499 = vmatpush.msra.mxu0 %v133
    %500 = vmatpush.msra.mxu0 %v132
    %501 = vmatpush.msra.mxu0 %v131
    %502 = vmatmul.f32.gmra.mxu0 %v484
    %v503 = vpop.f32.mrf.mxu0
    %v504 = vadd.f32 %v165, %v503
    %505 = vmatmul.f32.gmra.mxu0 %v485
    %v506 = vpop.f32.mrf.mxu0
    %v507 = vadd.f32 %v165, %v506
    %508 = vdwg.mxu0
    %v509 = vmax.f32 %v504, 0.0
    %v510 = vmax.f32 %v507, 0.0
    %511 = vmatpush.msra.mxu0 %v162
    %512 = vmatpush.msra.mxu0 %v161
    %513 = vmatpush.msra.mxu0 %v160
    %514 = vmatpush.msra.mxu0 %v159
    %515 = vmatpush.msra.mxu0 %v158
    %516 = vmatpush.msra.mxu0 %v157
    %517 = vmatpush.msra.mxu0 %v156
    %518 = vmatpush.msra.mxu0 %v155
    %519 = vmatpush.msra.mxu0 %v154
    %520 = vmatpush.msra.mxu0 %v153
    %521 = vmatpush.msra.mxu0 %v152
    %522 = vmatpush.msra.mxu0 %v151
    %523 = vmatpush.msra.mxu0 %v150
    %524 = vmatpush.msra.mxu0 %v149
    %525 = vmatpush.msra.mxu0 %v148
    %526 = vmatpush.msra.mxu0 %v147
    %527 = vmatmul.f32.gmra.mxu0 %v509
    %v528 = vpop.f32.mrf.mxu0
    %v529 = vadd.f32 %v169, %v528
    %530 = vmatmul.f32.gmra.mxu0 %v510
    %v531 = vpop.f32.mrf.mxu0
    %v532 = vadd.f32 %v169, %v531
    %533 = vdwg.mxu0
    %v534 = vadd.f32 %v267, %v529
    %v535 = vadd.f32 %v268, %v532
    %v536 = vmax.f32 %v534, 0.0
    %v537 = vmax.f32 %v535, 0.0
    %v538 = vpack.c.bf16 %v537, %v536
    %v540 = vsel %vm231, %v129, 0
    %542 = vmatpush.bf16.msra.mxu0 0
    %543 = vmatpush.bf16.msra.mxu0 0
    %544 = vmatpush.bf16.msra.mxu0 0
    %545 = vmatpush.bf16.msra.mxu0 0
    %546 = vmatpush.bf16.msra.mxu0 0
    %547 = vmatpush.bf16.msra.mxu0 0
    %548 = vmatpush.bf16.msra.mxu0 0
    %549 = vmatpush.bf16.msra.mxu0 %v538
    %550 = vmatmul.bf16.gmra.mxu0 %v540
    %v551 = vpop.f32.mrf.mxu0
    %v552 = vadd.f32 0.0, %v551
    %v553 = vpop.f32.mrf.mxu0
    %554 = vdwg.mxu0
    %v555 = vld [vmem:[%s13] sm:$0xff]
    %v556 = vld [vmem:[%s13 + $0x8] sm:$0xff]
    %v557 = vld [vmem:[#allocation8] sm:$0xff]
    %v558 = vld [vmem:[#allocation8 + $0x8] sm:$0xff]
    %v559 = vld [vmem:[#allocation8 + $0x10] sm:$0xff]
    %v560 = vld [vmem:[#allocation8 + $0x18] sm:$0xff]
    %v561 = vld [vmem:[#allocation8 + $0x20] sm:$0xff]
    %v562 = vld [vmem:[#allocation8 + $0x28] sm:$0xff]
    %v563 = vld [vmem:[#allocation8 + $0x30] sm:$0xff]
    %v564 = vld [vmem:[#allocation8 + $0x38] sm:$0xff]
    %v565 = vld [vmem:[#allocation8 + $0x40] sm:$0xff]
    %v566 = vld [vmem:[#allocation8 + $0x48] sm:$0xff]
    %v567 = vld [vmem:[#allocation8 + $0x50] sm:$0xff]
    %v568 = vld [vmem:[#allocation8 + $0x58] sm:$0xff]
    %v569 = vld [vmem:[#allocation8 + $0x60] sm:$0xff]
    %v570 = vld [vmem:[#allocation8 + $0x68] sm:$0xff]
    %v571 = vld [vmem:[#allocation8 + $0x70] sm:$0xff]
    %v572 = vld [vmem:[#allocation8 + $0x78] sm:$0xff]
    %573 = vmatpush.msra.mxu0 %v572
    %574 = vmatpush.msra.mxu0 %v571
    %575 = vmatpush.msra.mxu0 %v570
    %576 = vmatpush.msra.mxu0 %v569
    %577 = vmatpush.msra.mxu0 %v568
    %578 = vmatpush.msra.mxu0 %v567
    %579 = vmatpush.msra.mxu0 %v566
    %580 = vmatpush.msra.mxu0 %v565
    %581 = vmatpush.msra.mxu0 %v564
    %582 = vmatpush.msra.mxu0 %v563
    %583 = vmatpush.msra.mxu0 %v562
    %584 = vmatpush.msra.mxu0 %v561
    %585 = vmatpush.msra.mxu0 %v560
    %586 = vmatpush.msra.mxu0 %v559
    %587 = vmatpush.msra.mxu0 %v558
    %588 = vmatpush.msra.mxu0 %v557
    %589 = vmatmul.f32.gmra.mxu0 %v552
    %v590 = vpop.f32.mrf.mxu0
    %v591 = vadd.f32 0.0, %v590
    %592 = vdwg.mxu0
    %v594 = vsel %vm231, %v122, 0
    %596 = vmatpush.msra.mxu0 0.0
    %597 = vmatpush.msra.mxu0 0.0
    %598 = vmatpush.msra.mxu0 0.0
    %599 = vmatpush.msra.mxu0 0.0
    %600 = vmatpush.msra.mxu0 0.0
    %601 = vmatpush.msra.mxu0 0.0
    %602 = vmatpush.msra.mxu0 0.0
    %603 = vmatpush.msra.mxu0 0.0
    %604 = vmatpush.msra.mxu0 0.0
    %605 = vmatpush.msra.mxu0 0.0
    %606 = vmatpush.msra.mxu0 0.0
    %607 = vmatpush.msra.mxu0 0.0
    %608 = vmatpush.msra.mxu0 0.0
    %609 = vmatpush.msra.mxu0 0.0
    %610 = vmatpush.msra.mxu0 %v556
    %611 = vmatpush.msra.mxu0 %v555
    %612 = vmatmul.f32.gmra.mxu0 %v594
    %v613 = vpop.f32.mrf.mxu0
    %v614 = vadd.f32 %v591, %v613
    %615 = vdwg.mxu0
    %v616 = vld [vmem:[%s15] sm:$0x1]
    %v618 = vperm.slane %v616, 0
    %v620 = vadd.f32 %v614, %v618
    %v621 = vmax.f32 %v620, 0.0
    %v622 = vlaneseq
    %v623 = vand.u32 %v622, 127
    %vm624 = vcmp.lt.s32.totalorder %v623, 32
    %v625 = vsel %vm624, 1, 0
    %v626 = vcvt.s32.f32 %v625
    %627 = vadd.xlane.f32.xlu0 %v621
    %v628 = vpop.xlane.xlu0 %627
    %v629 = vmul.f32 %v628, 0.03125
    %v630 = vsub.f32 %v621, %v629
    %v631 = vmul.f32 %v630, %v626
    %v632 = vmul.f32 %v631, %v631
    %633 = vadd.xlane.f32.xlu0 %v632
    %v634 = vpop.xlane.xlu0 %633
    %v635 = vmul.f32 %v634, 0.03125
    %v636 = vadd.f32 %v635, 1e-05
    %v637 = vrsqrt.pop %v636
    %v638 = vmul.f32 %v637, %v636
    %v639 = vmul.f32 %v638, %v637
    %v640 = vmul.f32 0.5, %v639
    %v641 = vsub.f32 1.5, %v640
    %v642 = vmul.f32 %v637, %v641
    %vm643 = vweird.f32 %v636
    %vm644 = vweird.f32 %v637
    %vm645 = vmor %vm643, %vm644
    %v646 = vsel %vm645, %v637, %v642
    %v647 = vmul.f32 %v631, %v646
    %v648 = vld [vmem:[%s16] sm:$0x1]
    %v650 = vperm.slane %v648, 0
    %v652 = vmul.f32 %v647, %v650
    %v653 = vld [vmem:[%s17] sm:$0x1]
    %v655 = vperm.slane %v653, 0
    %v657 = vadd.f32 %v652, %v655
    %v658 = vmax.f32 %v657, 0.0
    %659 = vst [vmem:[#allocation10] sm:$0xff] %v658
    // Predicated region
    $region90: #{tpu_custom_call.1} parent=1 // pred_check
      _
    $region91: #{tpu_custom_call.1} parent=1 // pred_check_branch
      %661 = sbr.rel (0) target = $region93
    $region92: #{tpu_custom_call.1} parent=1 // pred_region
      %663 = vsyncadd [#allocation4], 0
      %s665 = sshll.u32 [#allocation10], 4
      %s666 = int_to_ptr.vmem [resolvable:$true] %s665
      %s667 = sshll.u32 %s18, 4
      %s668 = int_to_ptr.hbm [resolvable:$true] %s667
      %670 = dma.vmem_to_hbm [thread:$0]  %s666, 128, %s668, [#allocation4]
    $region93: #{tpu_custom_call.1} parent=1 // pred_fallthru
      _
    // Predicated region
    $region94: #{tpu_custom_call.1} parent=1 // pred_check
      _
    $region95: #{tpu_custom_call.1} parent=1 // pred_check_branch
      %672 = sbr.rel (0) target = $region97
    $region96: #{tpu_custom_call.1} parent=1 // pred_region
      %674 = dma.done [#allocation4], 128
    $region97: #{tpu_custom_call.1} parent=1 // pred_fallthru
      _
    %675 = vsyncpa [#allocation3], 1
    %676 = vsyncpa [#allocation6], 1
    %677 = vsyncpa [#allocation9], 1
    %678 = vsyncpa [#allocation4], 1

</llo_original>
